<compile_context>
chip_gen: v6e
topology: v6e:2x2x1
jax: 0.10.0
libtpu: 0.0.40
codegen_flags: <defaults>
</compile_context>

<pallas_src>
import bisect
import math

import jax
import jax.numpy as jnp
from jax.experimental import pallas as pl
from jax.experimental.pallas import tpu as pltpu


def _make_sequential_scheduler_call(milestones, gain):
    """Build a jit-cached pallas_call with milestones/gain baked in."""
    milestones = tuple(sorted(int(m) for m in milestones))
    gain = float(gain)

    def kernel(steps_ref, values_ref, out_ref):
        steps = steps_ref[0]  # int32 scalar in SMEM

        # bisect.bisect_right(milestones, steps) == #{m : m <= steps},
        # unrolled at trace time into a few scalar compares + adds.
        idx = jnp.int32(0)
        for m in milestones:  # static tuple -> unrolled
            idx = idx + jnp.where(steps >= jnp.int32(m), jnp.int32(1), jnp.int32(0))

        # Active child scheduler's value (SMEM table lookup), scaled by the
        # parent SequentialScheduler's gain (forward hook).
        out_ref[0, 0] = values_ref[idx] * jnp.float32(gain)

    call = pl.pallas_call(
        kernel,
        out_shape=jax.ShapeDtypeStruct((1, 1), jnp.float32),
        in_specs=[
            pl.BlockSpec(memory_space=pltpu.MemorySpace.SMEM),  # steps
            pl.BlockSpec(memory_space=pltpu.MemorySpace.SMEM),  # child values
        ],
        out_specs=pl.BlockSpec(memory_space=pltpu.MemorySpace.SMEM),
    )
    return jax.jit(call)


class SequentialSchedulerPallas:
    """Pallas-backed SequentialScheduler whose children are BaseSchedulers."""

    def __init__(self, *, milestones, scheduler_gains, gain=1.0):
        self._milestones = tuple(sorted(int(m) for m in milestones))
        assert len(scheduler_gains) == len(self._milestones) + 1
        self._gain = float(gain)
        # BaseScheduler children: their value is simply their own gain and does
        # not depend on their steps, so a constant value table suffices.
        # TODO(synk): step-dependent child schedulers would need their values
        # recomputed on the host (or in a fused kernel) each step before
        # being passed in as this SMEM table.
        self._values = jnp.asarray(scheduler_gains, dtype=jnp.float32)
        self._steps = 1  # steps start at 1, as in BaseScheduler
        self._call = _make_sequential_scheduler_call(self._milestones, self._gain)

    @property
    def steps(self):
        return self._steps

    @steps.setter
    def steps(self, value):
        self._steps = int(value)

    def step(self):
        # Child BaseScheduler.step() has no effect on its value; parent step:
        self._steps += 1

    def __call__(self):
        steps = jnp.asarray([self._steps], dtype=jnp.int32)
        return self._call(steps, self._values)[0, 0]


def _reference(milestones, scheduler_gains, steps, gain=1.0):
    """Pure-python reference matching the PyTorch module."""
    i = bisect.bisect(sorted(milestones), steps)
    return gain * scheduler_gains[i]


if __name__ == "__main__":
    key = jax.random.PRNGKey(0)
    k_gains, k_steps = jax.random.split(key)

    # Small deterministic "module": 3 BaseScheduler children, 2 milestones.
    milestones = [3, 7]
    scheduler_gains = [
        float(g)
        for g in jax.device_get(
            jax.random.uniform(k_gains, (3,), minval=0.1, maxval=1.0)
        )
    ]
    gain = 2.0

    sched = SequentialSchedulerPallas(
        milestones=milestones, scheduler_gains=scheduler_gains, gain=gain
    )

    # Walk steps 1..10 with step(), mirroring the module's intended usage.
    for s in range(1, 11):
        assert sched.steps == s
        val = jax.block_until_ready(sched())
        ref = _reference(milestones, scheduler_gains, s, gain)
        assert math.isclose(float(val), ref, rel_tol=1e-6, abs_tol=1e-7), (
            s, float(val), ref)
        sched.step()

    # Randomized step jumps (deterministic via PRNGKey(0)).
    rand_steps = jax.device_get(
        jax.random.randint(k_steps, (8,), minval=1, maxval=12))
    for s in rand_steps:
        sched.steps = int(s)
        val = jax.block_until_ready(sched())
        ref = _reference(milestones, scheduler_gains, int(s), gain)
        assert math.isclose(float(val), ref, rel_tol=1e-6, abs_tol=1e-7), (
            int(s), float(val), ref)

    print("KERNEL_OK")
</pallas_src>

<mosaic_0001>
module attributes {stable_mosaic.version = 11 : i64} {
  func.func @kernel(%arg0: memref<1xi32, #tpu.memory_space<smem>>, %arg1: memref<3xf32, #tpu.memory_space<smem>>, %arg2: memref<1x1xf32, #tpu.memory_space<smem>>) attributes {dimension_semantics = [], scalar_prefetch = 0 : i64, scratch_operands = 0 : i64, tpu.core_type = #tpu.core_type<tc>} {
    %c0 = arith.constant 0 : index
    %0 = memref.load %arg0[%c0] : memref<1xi32, #tpu.memory_space<smem>>
    %c3_i32 = arith.constant 3 : i32
    %1 = arith.cmpi sge, %0, %c3_i32 : i32
    %c1_i32 = arith.constant 1 : i32
    %c0_i32 = arith.constant 0 : i32
    %2 = arith.select %1, %c1_i32, %c0_i32 : i32
    %c0_i32_0 = arith.constant 0 : i32
    %3 = arith.addi %c0_i32_0, %2 : i32
    %c7_i32 = arith.constant 7 : i32
    %4 = arith.cmpi sge, %0, %c7_i32 : i32
    %c1_i32_1 = arith.constant 1 : i32
    %c0_i32_2 = arith.constant 0 : i32
    %5 = arith.select %4, %c1_i32_1, %c0_i32_2 : i32
    %6 = arith.addi %3, %5 : i32
    %7 = arith.index_cast %6 : i32 to index
    %8 = memref.load %arg1[%7] : memref<3xf32, #tpu.memory_space<smem>>
    %cst = arith.constant 2.000000e+00 : f32
    %9 = arith.mulf %8, %cst : f32
    %c0_3 = arith.constant 0 : index
    %c0_4 = arith.constant 0 : index
    %10 = memref.load %arg2[%c0_3, %c0_4] : memref<1x1xf32, #tpu.memory_space<smem>>
    memref.store %9, %arg2[%c0_3, %c0_4] : memref<1x1xf32, #tpu.memory_space<smem>>
    return
  }
}

</mosaic_0001>

<llo_original>
// kernel: tpu_custom_call.1
$region0: #{tpu_custom_call.1}
  #allocation0 [shape = 'u32[]', space=smem, size = 0x4, offset = 0x4, fixed_abs, tag = 'smem constant byte address 0x4 - core index']
  #allocation1 [shape = 'u32[144,128]{1,0:T(1,128)}', space=vmem, size = 0x12000, scoped, tag = 'internal scratch']
  #allocation2 [shape = 's32[1]{0:T(128)S(6)}', space=smem, size = 0x200, scoped, tag = 'scoped memory for tpu_custom_call.1']
  %s0 = inlined_call_operand.<no memory space> [shape: s32[1], index: 0, kind: input, shape index: {}]
  %s1 = inlined_call_operand.vmem [shape: f32[3], index: 1, kind: input, shape index: {}]
  %s2 = inlined_call_operand.hbm [shape: f32[1,1], index: 2, kind: output, shape index: {}]
  %s3 = sld [smem:[#allocation0]]
  $region22: #{tpu_custom_call.1} parent=0
    _
  %s5 = ssub.s32 1, %s3
  %s6 = scalar_select 0, %s5, %s3
  %7 = sst [smem:[#allocation2]] %s0
  $region1: #{tpu_custom_call.1} parent=0
    #allocation3 [shape = 'u8[512]{0}', space=smem, size = 0x200, scoped, tag = 'input window, operand 1, single buffered']
    #allocation4 [shape = 's32[1]{0}', space=sflag, size = 0x4, scoped, tag = 'scoped memory for tpu_custom_call.1']
    #allocation5 [shape = 's32[1]{0}', space=sflag, size = 0x4, scoped, tag = 'scoped memory for tpu_custom_call.1']
    #allocation6 [shape = 'u8[512]{0}', space=smem, size = 0x200, scoped, tag = 'output window, operand 0, single buffered']
    %8 = vsyncpa [#allocation5], 0
    %9 = vsyncpa [#allocation4], 0
    // Predicated region
    $region2: #{tpu_custom_call.1} parent=1 // pred_check
      _
    $region3: #{tpu_custom_call.1} parent=1 // pred_check_branch
      %11 = sbr.rel (0) target = $region5
    $region4: #{tpu_custom_call.1} parent=1 // pred_region
      _
    $region5: #{tpu_custom_call.1} parent=1 // pred_fallthru
      _
    // Predicated region
    $region6: #{tpu_custom_call.1} parent=1 // pred_check
      _
    $region7: #{tpu_custom_call.1} parent=1 // pred_check_branch
      %13 = sbr.rel (0) target = $region9
    $region8: #{tpu_custom_call.1} parent=1 // pred_region
      %s15 = ssub.s32 16, 16
      %16 = vsyncadd [#allocation5], %s15
      %s18 = sshll.u32 %s1, 4
      %s19 = int_to_ptr.vmem [resolvable:$true] %s18
      %21 = dma.vmem_to_smem %s19, 16, [#allocation3], [#allocation5]
    $region9: #{tpu_custom_call.1} parent=1 // pred_fallthru
      _
    // Predicated region
    $region10: #{tpu_custom_call.1} parent=1 // pred_check
      _
    $region11: #{tpu_custom_call.1} parent=1 // pred_check_branch
      %23 = sbr.rel (0) target = $region13
    $region12: #{tpu_custom_call.1} parent=1 // pred_region
      %24 = dma.done [#allocation5], 16
    $region13: #{tpu_custom_call.1} parent=1 // pred_fallthru
      _
    %25 = sfence
    %s26 = sld [smem:[#allocation2]]
    %p27 = scmp.ge.s32.totalorder %s26, 3
    %s28 = scalar_select %p27, 1, 0
    %p29 = scmp.ge.s32.totalorder %s26, 7
    %s30 = scalar_select %p29, 1, 0
    %s31 = sadd.s32 %s28, %s30
    %s32 = sld [smem:[#allocation3 + %s31]]
    %s33 = smul.f32 %s32, 2.0
    %s34 = scalar_lea.smem [#allocation6], 0
    %35 = sst [smem:[%s34]] %s33
    // Predicated region
    $region14: #{tpu_custom_call.1} parent=1 // pred_check
      _
    $region15: #{tpu_custom_call.1} parent=1 // pred_check_branch
      %37 = sbr.rel (0) target = $region17
    $region16: #{tpu_custom_call.1} parent=1 // pred_region
      %s39 = ssub.s32 16, 16
      %40 = vsyncadd [#allocation4], %s39
      %43 = dma.smem_to_hbm [#allocation6], 16, %s2, [#allocation4]
    $region17: #{tpu_custom_call.1} parent=1 // pred_fallthru
      _
    // Predicated region
    $region18: #{tpu_custom_call.1} parent=1 // pred_check
      _
    $region19: #{tpu_custom_call.1} parent=1 // pred_check_branch
      %45 = sbr.rel (0) target = $region21
    $region20: #{tpu_custom_call.1} parent=1 // pred_region
      %46 = dma.done [#allocation4], 16
    $region21: #{tpu_custom_call.1} parent=1 // pred_fallthru
      _
    %47 = sfence
    %48 = vsyncpa [#allocation4], 1
    %49 = vsyncpa [#allocation5], 1

</llo_original>
